<compile_context>
chip_gen: v7x
topology: tpu7x:2x2x1
jax: 0.10.0
libtpu: 0.0.40
codegen_flags: <defaults>
</compile_context>

<pallas_src>
import functools

import jax
import jax.numpy as jnp
from jax import lax
from jax.experimental import pallas as pl
from jax.experimental.pallas import tpu as pltpu


def _attention_kernel(x_ref, y_ref, *out_refs, mxu_dtype, return_a):
    # Refs: x (Bt, Lx, H), y (Bt, Ly, H); outputs x_atten (Bt, Lx, H),
    # y_atten (Bt, Ly, H) and optionally a (Bt, Lx, Ly).
    if return_a:
        xatt_ref, yatt_ref, a_ref = out_refs
    else:
        (xatt_ref, yatt_ref), a_ref = out_refs, None

    x = x_ref[...]
    y = y_ref[...]
    if mxu_dtype is not None:
        xm = x.astype(mxu_dtype)
        ym = y.astype(mxu_dtype)
    else:
        xm, ym = x, y

    # Scores: contract over H, batched over dim 0; no explicit transpose of y.
    a = lax.dot_general(
        xm, ym,
        dimension_numbers=(((2,), (2,)), ((0,), (0,))),
        preferred_element_type=jnp.float32)              # (Bt, Lx, Ly) f32

    # Store scores as soon as they are ready (shortens live ranges, overlaps
    # writeback with the softmax / second matmuls).
    if a_ref is not None:
        a_ref[...] = a.astype(a_ref.dtype)

    # --- row softmax over Ly (PyTorch dim=2), then @ y -> x_atten ----------
    m2 = jnp.max(a, axis=-1, keepdims=True)
    e2 = jnp.exp(a - m2)
    p2 = e2 / jnp.sum(e2, axis=-1, keepdims=True)        # exact divide
    x_atten = lax.dot_general(
        p2.astype(ym.dtype), ym,
        dimension_numbers=(((2,), (1,)), ((0,), (0,))),
        preferred_element_type=jnp.float32)               # (Bt, Lx, H)
    xatt_ref[...] = x_atten.astype(xatt_ref.dtype)

    # --- column softmax over Lx (PyTorch dim=1), then contract Lx with x ---
    # Equivalent to bmm(transpose(softmax(a, 1), 2, 1), x) with the transpose
    # folded into dot_general's contracting dims (no XLU transpose).
    m1 = jnp.max(a, axis=1, keepdims=True)
    e1 = jnp.exp(a - m1)
    p1 = e1 / jnp.sum(e1, axis=1, keepdims=True)          # exact divide
    y_atten = lax.dot_general(
        p1.astype(xm.dtype), xm,
        dimension_numbers=(((1,), (1,)), ((0,), (0,))),
        preferred_element_type=jnp.float32)                # (Bt, Ly, H)
    yatt_ref[...] = y_atten.astype(yatt_ref.dtype)


def attention_pallas(x, y, *, mxu_dtype=None, a_dtype=None, return_a=True,
                     vmem_fraction=0.4):
    """x: (B, Lx, H), y: (B, Ly, H) -> (x_atten, y_atten[, a_]).

    mxu_dtype:  None -> matmuls run in the input dtype (exact module parity).
                jnp.bfloat16 -> feed the MXU bf16 operands (f32 accumulation).
    a_dtype:    dtype of the returned score matrix (default: x.dtype).  Pass
                jnp.bfloat16 to halve its HBM writeback cost.
    return_a:   False -> skip materializing the (B, Lx, Ly) score matrix.
    """
    B, Lx, H = x.shape
    B2, Ly, H2 = y.shape
    assert B == B2 and H == H2, "batch / hidden mismatch"

    out_dtype = x.dtype
    a_dtype = jnp.dtype(out_dtype if a_dtype is None else a_dtype)

    # ---- generation-aware VMEM capacity ------------------------------------
    try:
        info = pltpu.get_tpu_info()
        vmem_cap = int(getattr(info, "vmem_capacity_bytes", 64 << 20))
    except Exception:                      # CPU / interpret fallback
        vmem_cap = 64 << 20                # smallest (v7x) -> always safe

    in_item = jnp.dtype(x.dtype).itemsize
    out_item = jnp.dtype(out_dtype).itemsize
    a_item = a_dtype.itemsize

    # Per-batch-element bytes: double-buffered I/O blocks + single-buffered
    # f32 intermediates (a, exp/prob live ranges, f32 matmul accumulators).
    io_bytes = ((Lx + Ly) * H * in_item                 # x, y blocks
                + (Lx + Ly) * H * out_item              # x_atten, y_atten
                + (Lx * Ly * a_item if return_a else 0))
    interm_bytes = (3 * Lx * Ly + 2 * (Lx + Ly) * H) * 4
    per_batch_bytes = 2 * io_bytes + interm_bytes

    budget = int(vmem_cap * vmem_fraction)
    bt = max(1, budget // max(per_batch_bytes, 1))
    if B >= 2:
        # Keep at least 2 grid steps so the "parallel" axis can be split
        # across v7x's two TensorCores (no-op cost on v5e/v6e).
        bt = min(bt, pl.cdiv(B, 2))
    bt = min(bt, B)

    n_steps = pl.cdiv(B, bt)
    b_pad = n_steps * bt
    if b_pad != B:
        x = jnp.pad(x, ((0, b_pad - B), (0, 0), (0, 0)))
        y = jnp.pad(y, ((0, b_pad - B), (0, 0), (0, 0)))

    vmem_limit = int(min(bt * per_batch_bytes + (4 << 20),
                         int(vmem_cap * 0.9)))
    vmem_limit = max(vmem_limit, 16 << 20)

    out_shape = [jax.ShapeDtypeStruct((b_pad, Lx, H), out_dtype),
                 jax.ShapeDtypeStruct((b_pad, Ly, H), out_dtype)]
    out_specs = [pl.BlockSpec((bt, Lx, H), lambda b: (b, 0, 0)),
                 pl.BlockSpec((bt, Ly, H), lambda b: (b, 0, 0))]
    if return_a:
        out_shape.append(jax.ShapeDtypeStruct((b_pad, Lx, Ly), a_dtype))
        out_specs.append(pl.BlockSpec((bt, Lx, Ly), lambda b: (b, 0, 0)))

    kernel = functools.partial(_attention_kernel,
                               mxu_dtype=mxu_dtype, return_a=return_a)

    outs = pl.pallas_call(
        kernel,
        out_shape=tuple(out_shape),
        grid=(n_steps,),
        in_specs=[pl.BlockSpec((bt, Lx, H), lambda b: (b, 0, 0)),
                  pl.BlockSpec((bt, Ly, H), lambda b: (b, 0, 0))],
        out_specs=tuple(out_specs),
        compiler_params=pltpu.CompilerParams(
            dimension_semantics=("parallel",),
            vmem_limit_bytes=vmem_limit,
        ),
    )(x, y)

    if b_pad != B:
        outs = tuple(o[:B] for o in outs)
    return outs


def attention_reference(x, y):
    a = jnp.einsum("bld,bmd->blm", x, y)
    x_atten = jnp.einsum("blm,bmd->bld", jax.nn.softmax(a, axis=2), y)
    y_atten = jnp.einsum("bml,bmd->bld", jax.nn.softmax(a, axis=1), x)
    return x_atten, y_atten, a


if __name__ == "__main__":
    key = jax.random.PRNGKey(0)
    k1, k2, k3 = jax.random.split(key, 3)

    B, Lx, Ly, H = 2, 8, 16, 32

    x = jax.random.normal(k1, (B, Lx, H), dtype=jnp.float32)
    y = jax.random.normal(k2, (B, Ly, H), dtype=jnp.float32)

    # self.fc from __init__ is never used in forward(); init for parity only.
    fc_w = jax.random.normal(k3, (H, H), dtype=jnp.float32) / jnp.sqrt(H)
    del fc_w  # TODO(synk): unused in the PyTorch forward, so not translated.

    # ---- default path: exact f32, full module-precision parity -------------
    x_att, y_att, a_ = jax.block_until_ready(attention_pallas(x, y))
    xr, yr, ar = attention_reference(x, y)
    assert jnp.allclose(a_, ar, atol=1e-4, rtol=1e-4)
    assert jnp.allclose(x_att, xr, atol=1e-4, rtol=1e-4)
    assert jnp.allclose(y_att, yr, atol=1e-4, rtol=1e-4)

    # ---- bf16-MXU fast path (perf option): skip a_, bf16 operands ----------
    # Compared against a reference computed from bf16-rounded inputs so the
    # tolerance only has to absorb the probability-matrix bf16 cast.
    x_att_b, y_att_b = jax.block_until_ready(
        attention_pallas(x, y, mxu_dtype=jnp.bfloat16, return_a=False))
    xb = x.astype(jnp.bfloat16).astype(jnp.float32)
    yb = y.astype(jnp.bfloat16).astype(jnp.float32)
    xr_b, yr_b, _ = attention_reference(xb, yb)
    assert jnp.allclose(x_att_b, xr_b, atol=3e-2, rtol=3e-2)
    assert jnp.allclose(y_att_b, yr_b, atol=3e-2, rtol=3e-2)

    print("KERNEL_OK")
</pallas_src>

<mosaic_0001>
module attributes {stable_mosaic.version = 11 : i64} {
  func.func @_attention_kernel(%arg0: i32, %arg1: memref<1x8x32xf32, #tpu.memory_space<vmem>>, %arg2: memref<1x16x32xf32, #tpu.memory_space<vmem>>, %arg3: memref<1x8x32xf32, #tpu.memory_space<vmem>>, %arg4: memref<1x16x32xf32, #tpu.memory_space<vmem>>, %arg5: memref<1x8x16xf32, #tpu.memory_space<vmem>>) attributes {dimension_semantics = [#tpu.dimension_semantics<parallel>], iteration_bounds = array<i64: 2>, scalar_prefetch = 0 : i64, scratch_operands = 0 : i64, tpu.core_type = #tpu.core_type<tc>, window_params = [{transform_indices = @transform_0, window_bounds = array<i64: 1, 8, 32>}, {transform_indices = @transform_1, window_bounds = array<i64: 1, 16, 32>}, {transform_indices = @transform_2, window_bounds = array<i64: 1, 8, 32>}, {transform_indices = @transform_3, window_bounds = array<i64: 1, 16, 32>}, {transform_indices = @transform_4, window_bounds = array<i64: 1, 8, 16>}]} {
    %c0 = arith.constant 0 : index
    %c0_0 = arith.constant 0 : index
    %c0_1 = arith.constant 0 : index
    %0 = vector.load %arg1[%c0, %c0_0, %c0_1] : memref<1x8x32xf32, #tpu.memory_space<vmem>>, vector<1x8x32xf32>
    %c0_2 = arith.constant 0 : index
    %c0_3 = arith.constant 0 : index
    %c0_4 = arith.constant 0 : index
    %1 = vector.load %arg2[%c0_2, %c0_3, %c0_4] : memref<1x16x32xf32, #tpu.memory_space<vmem>>, vector<1x16x32xf32>
    %cst = arith.constant dense<0.000000e+00> : vector<1x8x16xf32>
    %2 = tpu.matmul %0, %1, %cst {dimension_numbers = #tpu.dot_dimension_numbers<[2], [2], [1], [1], [0, 0, 0, 1, 1, 1], [0], [0]>} : vector<1x8x32xf32>, vector<1x16x32xf32>, vector<1x8x16xf32> -> vector<1x8x16xf32>
    %c0_5 = arith.constant 0 : index
    %c0_6 = arith.constant 0 : index
    %c0_7 = arith.constant 0 : index
    %3 = vector.load %arg5[%c0_5, %c0_6, %c0_7] : memref<1x8x16xf32, #tpu.memory_space<vmem>>, vector<1x8x16xf32>
    tpu.vector_store %arg5[%c0_5, %c0_6, %c0_7], %2 {strides = array<i32>} : memref<1x8x16xf32, #tpu.memory_space<vmem>>, vector<1x8x16xf32>,
    %cst_8 = arith.constant dense<0xFF800000> : vector<1x8xf32>
    %4 = vector.multi_reduction <maximumf>, %2, %cst_8 [2] : vector<1x8x16xf32> to vector<1x8xf32>
    %5 = vector.shape_cast %4 : vector<1x8xf32> to vector<1x8x1xf32>
    %6 = vector.broadcast %5 : vector<1x8x1xf32> to vector<1x8x16xf32>
    %7 = arith.subf %2, %6 : vector<1x8x16xf32>
    %8 = math.exp %7 : vector<1x8x16xf32>
    %cst_9 = arith.constant dense<0.000000e+00> : vector<1x8xf32>
    %9 = vector.multi_reduction <add>, %8, %cst_9 [2] : vector<1x8x16xf32> to vector<1x8xf32>
    %10 = vector.shape_cast %9 : vector<1x8xf32> to vector<1x8x1xf32>
    %11 = vector.broadcast %10 : vector<1x8x1xf32> to vector<1x8x16xf32>
    %12 = arith.divf %8, %11 : vector<1x8x16xf32>
    %cst_10 = arith.constant dense<0.000000e+00> : vector<1x8x32xf32>
    %13 = tpu.matmul %12, %1, %cst_10 {dimension_numbers = #tpu.dot_dimension_numbers<[2], [1], [1], [2], [0, 0, 0, 1, 1, 2], [0], [0]>} : vector<1x8x16xf32>, vector<1x16x32xf32>, vector<1x8x32xf32> -> vector<1x8x32xf32>
    %c0_11 = arith.constant 0 : index
    %c0_12 = arith.constant 0 : index
    %c0_13 = arith.constant 0 : index
    %14 = vector.load %arg3[%c0_11, %c0_12, %c0_13] : memref<1x8x32xf32, #tpu.memory_space<vmem>>, vector<1x8x32xf32>
    tpu.vector_store %arg3[%c0_11, %c0_12, %c0_13], %13 {strides = array<i32>} : memref<1x8x32xf32, #tpu.memory_space<vmem>>, vector<1x8x32xf32>,
    %cst_14 = arith.constant dense<0xFF800000> : vector<1x16xf32>
    %15 = vector.multi_reduction <maximumf>, %2, %cst_14 [1] : vector<1x8x16xf32> to vector<1x16xf32>
    %16 = vector.shape_cast %15 : vector<1x16xf32> to vector<1x1x16xf32>
    %17 = vector.broadcast %16 : vector<1x1x16xf32> to vector<1x8x16xf32>
    %18 = arith.subf %2, %17 : vector<1x8x16xf32>
    %19 = math.exp %18 : vector<1x8x16xf32>
    %cst_15 = arith.constant dense<0.000000e+00> : vector<1x16xf32>
    %20 = vector.multi_reduction <add>, %19, %cst_15 [1] : vector<1x8x16xf32> to vector<1x16xf32>
    %21 = vector.shape_cast %20 : vector<1x16xf32> to vector<1x1x16xf32>
    %22 = vector.broadcast %21 : vector<1x1x16xf32> to vector<1x8x16xf32>
    %23 = arith.divf %19, %22 : vector<1x8x16xf32>
    %cst_16 = arith.constant dense<0.000000e+00> : vector<1x16x32xf32>
    %24 = tpu.matmul %23, %0, %cst_16 {dimension_numbers = #tpu.dot_dimension_numbers<[1], [1], [2], [2], [0, 0, 0, 2, 1, 2], [0], [0]>} : vector<1x8x16xf32>, vector<1x8x32xf32>, vector<1x16x32xf32> -> vector<1x16x32xf32>
    %c0_17 = arith.constant 0 : index
    %c0_18 = arith.constant 0 : index
    %c0_19 = arith.constant 0 : index
    %25 = vector.load %arg4[%c0_17, %c0_18, %c0_19] : memref<1x16x32xf32, #tpu.memory_space<vmem>>, vector<1x16x32xf32>
    tpu.vector_store %arg4[%c0_17, %c0_18, %c0_19], %24 {strides = array<i32>} : memref<1x16x32xf32, #tpu.memory_space<vmem>>, vector<1x16x32xf32>,
    return
  }
  func.func @transform_0(%arg0: i32) -> (i32, i32, i32) {
    %c0_i32 = arith.constant 0 : i32
    %c0_i32_0 = arith.constant 0 : i32
    %c0_i32_1 = arith.constant 0 : i32
    return %arg0, %c0_i32, %c0_i32_0 : i32, i32, i32
  }
  func.func @transform_1(%arg0: i32) -> (i32, i32, i32) {
    %c0_i32 = arith.constant 0 : i32
    %c0_i32_0 = arith.constant 0 : i32
    %c0_i32_1 = arith.constant 0 : i32
    return %arg0, %c0_i32, %c0_i32_0 : i32, i32, i32
  }
  func.func @transform_2(%arg0: i32) -> (i32, i32, i32) {
    %c0_i32 = arith.constant 0 : i32
    %c0_i32_0 = arith.constant 0 : i32
    %c0_i32_1 = arith.constant 0 : i32
    return %arg0, %c0_i32, %c0_i32_0 : i32, i32, i32
  }
  func.func @transform_3(%arg0: i32) -> (i32, i32, i32) {
    %c0_i32 = arith.constant 0 : i32
    %c0_i32_0 = arith.constant 0 : i32
    %c0_i32_1 = arith.constant 0 : i32
    return %arg0, %c0_i32, %c0_i32_0 : i32, i32, i32
  }
  func.func @transform_4(%arg0: i32) -> (i32, i32, i32) {
    %c0_i32 = arith.constant 0 : i32
    %c0_i32_0 = arith.constant 0 : i32
    %c0_i32_1 = arith.constant 0 : i32
    return %arg0, %c0_i32, %c0_i32_0 : i32, i32, i32
  }
}

</mosaic_0001>

<llo_original>
// kernel: tpu_custom_call.1
$region0: #{tpu_custom_call.1}
  #allocation0 [shape = 'u32[]', space=smem, size = 0x4, offset = 0x4, fixed_abs, tag = 'smem constant byte address 0x4 - core index']
  #allocation1 [shape = 'u32[144,128]{1,0:T(1,128)}', space=vmem, size = 0x12000, scoped, tag = 'internal scratch']
  %s0 = inlined_call_operand.hbm [shape: f32[2,8,32], index: 0, kind: input, shape index: {}]
  %s1 = inlined_call_operand.hbm [shape: f32[2,16,32], index: 1, kind: input, shape index: {}]
  %s2 = inlined_call_operand.hbm [shape: f32[2,8,32], index: 2, kind: output, shape index: {0}]
  %s3 = inlined_call_operand.hbm [shape: f32[2,16,32], index: 3, kind: output, shape index: {1}]
  %s4 = inlined_call_operand.hbm [shape: f32[2,8,16], index: 4, kind: output, shape index: {2}]
  %5 = xla_tuple %s2, %s3, %s4
  %s6 = sld [smem:[#allocation0]]
  $region65: #{tpu_custom_call.1} parent=0
    _
  %s8 = ssub.s32 1, %s6
  %s9 = scalar_select 0, %s8, %s6
  $region1: #{tpu_custom_call.1} parent=0
    #allocation2 [shape = 'u8[8192]{0}', space=vmem, size = 0x2000, scoped, tag = 'input window, operand 0']
    #allocation3 [shape = 's32[2]{0}', space=sflag, size = 0x8, scoped, tag = 'scoped memory for tpu_custom_call.1']
    #allocation4 [shape = 's32[2]{0}', space=sflag, size = 0x8, scoped, tag = 'scoped memory for tpu_custom_call.1']
    #allocation5 [shape = 'u8[16384]{0}', space=vmem, size = 0x4000, scoped, tag = 'input window, operand 1']
    #allocation6 [shape = 's32[2]{0}', space=sflag, size = 0x8, scoped, tag = 'scoped memory for tpu_custom_call.1']
    #allocation7 [shape = 'u8[8192]{0}', space=vmem, size = 0x2000, scoped, tag = 'output window, operand 0']
    #allocation8 [shape = 'u8[16384]{0}', space=vmem, size = 0x4000, scoped, tag = 'output window, operand 1']
    #allocation9 [shape = 's32[2]{0}', space=sflag, size = 0x8, scoped, tag = 'scoped memory for tpu_custom_call.1']
    #allocation10 [shape = 'u8[8192]{0}', space=vmem, size = 0x2000, scoped, tag = 'output window, operand 2']
    %10 = vsyncpa [#allocation3], 0
    %s11 = scalar_lea.sflag [#allocation3], 1
    %12 = vsyncpa %s11, 0
    %13 = vsyncpa [#allocation6], 0
    %s14 = scalar_lea.sflag [#allocation6], 1
    %15 = vsyncpa %s14, 0
    %16 = vsyncpa [#allocation4], 0
    %s17 = scalar_lea.sflag [#allocation4], 1
    %18 = vsyncpa %s17, 0
    %19 = vsyncpa [#allocation9], 0
    %s20 = scalar_lea.sflag [#allocation9], 1
    %21 = vsyncpa %s20, 0
    loop: start=0, step=1, limit=4
    $region2: #{tpu_custom_call.1} parent=1 // loop_pre_header
      _
    $region3: #{tpu_custom_call.1} parent=1 // loop_header
      %s23 = sphi 0, %s27
      %p24 = scmp.ge.s32.totalorder %s23, 4
      %s33 = sphi 0, %s35
      %s36 = sphi 0, %s33
      %s37 = sphi 0, %s36
      %s53 = sphi 0, %s37
      %s59 = sphi 0, %s61
      %s62 = sphi 0, %s59
      %s63 = sphi 0, %s62
      %s79 = sphi 0, %s63
      %s85 = sphi 0, %s87
      %s88 = sphi 0, %s85
      %s89 = sphi 0, %s88
      %s105 = sphi 0, %s89
      %s111 = sphi 0, %s113
      %s114 = sphi 0, %s111
      %s115 = sphi 0, %s114
      %s131 = sphi 0, %s115
      %s137 = sphi 0, %s139
      %s140 = sphi 0, %s137
      %s141 = sphi 0, %s140
      %s157 = sphi 0, %s141
    $region4: #{tpu_custom_call.1} parent=1 // loop_header_branch
      %26 = sbr.rel (%p24) target = $region8
    $region5: #{tpu_custom_call.1} parent=1 // loop_body
      %s28 = ssub.s32 %s23, 1
      %s29 = ssub.s32 %s23, 2
      %s30 = sadd.s32 %s23, 1
      %s31 = ssub.s32 %s23, %s30
      %p32 = scmp.eq.s32.totalorder %s31, 0
      %s34 = sadd.s32 %s33, 1
      %s35 = scalar_select %p32, %s33, %s34
      %p38 = pneg %p32
      %p39 = scmp.eq.s32.totalorder %s23, 1
      %p40 = por %p38, %p39
      %p41 = scmp.ne.s32.totalorder %s33, %s36
      %p42 = scmp.eq.s32.totalorder %s23, 0
      %p43 = por %p41, %p42
      %p44 = scmp.ne.s32.totalorder %s33, %s36
      %p45 = scmp.eq.s32.totalorder %s28, 1
      %p46 = por %p44, %p45
      %p47 = scmp.ne.s32.totalorder %s36, %s37
      %p48 = scmp.eq.s32.totalorder %s28, 0
      %p49 = por %p47, %p48
      %p50 = scmp.ne.s32.totalorder %s36, %s37
      %p51 = scmp.eq.s32.totalorder %s29, 1
      %p52 = por %p50, %p51
      %p54 = scmp.ne.s32.totalorder %s37, %s53
      %p55 = scmp.eq.s32.totalorder %s29, 0
      %p56 = por %p54, %p55
      %s57 = ssub.s32 %s23, %s30
      %p58 = scmp.eq.s32.totalorder %s57, 0
      %s60 = sadd.s32 %s59, 1
      %s61 = scalar_select %p58, %s59, %s60
      %p64 = pneg %p58
      %p65 = scmp.eq.s32.totalorder %s23, 1
      %p66 = por %p64, %p65
      %p67 = scmp.ne.s32.totalorder %s59, %s62
      %p68 = scmp.eq.s32.totalorder %s23, 0
      %p69 = por %p67, %p68
      %p70 = scmp.ne.s32.totalorder %s59, %s62
      %p71 = scmp.eq.s32.totalorder %s28, 1
      %p72 = por %p70, %p71
      %p73 = scmp.ne.s32.totalorder %s62, %s63
      %p74 = scmp.eq.s32.totalorder %s28, 0
      %p75 = por %p73, %p74
      %p76 = scmp.ne.s32.totalorder %s62, %s63
      %p77 = scmp.eq.s32.totalorder %s29, 1
      %p78 = por %p76, %p77
      %p80 = scmp.ne.s32.totalorder %s63, %s79
      %p81 = scmp.eq.s32.totalorder %s29, 0
      %p82 = por %p80, %p81
      %s83 = ssub.s32 %s23, %s30
      %p84 = scmp.eq.s32.totalorder %s83, 0
      %s86 = sadd.s32 %s85, 1
      %s87 = scalar_select %p84, %s85, %s86
      %p90 = pneg %p84
      %p91 = scmp.eq.s32.totalorder %s23, 1
      %p92 = por %p90, %p91
      %p93 = scmp.ne.s32.totalorder %s85, %s88
      %p94 = scmp.eq.s32.totalorder %s23, 0
      %p95 = por %p93, %p94
      %p96 = scmp.ne.s32.totalorder %s85, %s88
      %p97 = scmp.eq.s32.totalorder %s28, 1
      %p98 = por %p96, %p97
      %p99 = scmp.ne.s32.totalorder %s88, %s89
      %p100 = scmp.eq.s32.totalorder %s28, 0
      %p101 = por %p99, %p100
      %p102 = scmp.ne.s32.totalorder %s88, %s89
      %p103 = scmp.eq.s32.totalorder %s29, 1
      %p104 = por %p102, %p103
      %p106 = scmp.ne.s32.totalorder %s89, %s105
      %p107 = scmp.eq.s32.totalorder %s29, 0
      %p108 = por %p106, %p107
      %s109 = ssub.s32 %s23, %s30
      %p110 = scmp.eq.s32.totalorder %s109, 0
      %s112 = sadd.s32 %s111, 1
      %s113 = scalar_select %p110, %s111, %s112
      %p116 = pneg %p110
      %p117 = scmp.eq.s32.totalorder %s23, 1
      %p118 = por %p116, %p117
      %p119 = scmp.ne.s32.totalorder %s111, %s114
      %p120 = scmp.eq.s32.totalorder %s23, 0
      %p121 = por %p119, %p120
      %p122 = scmp.ne.s32.totalorder %s111, %s114
      %p123 = scmp.eq.s32.totalorder %s28, 1
      %p124 = por %p122, %p123
      %p125 = scmp.ne.s32.totalorder %s114, %s115
      %p126 = scmp.eq.s32.totalorder %s28, 0
      %p127 = por %p125, %p126
      %p128 = scmp.ne.s32.totalorder %s114, %s115
      %p129 = scmp.eq.s32.totalorder %s29, 1
      %p130 = por %p128, %p129
      %p132 = scmp.ne.s32.totalorder %s115, %s131
      %p133 = scmp.eq.s32.totalorder %s29, 0
      %p134 = por %p132, %p133
      %s135 = ssub.s32 %s23, %s30
      %p136 = scmp.eq.s32.totalorder %s135, 0
      %s138 = sadd.s32 %s137, 1
      %s139 = scalar_select %p136, %s137, %s138
      %p142 = pneg %p136
      %p143 = scmp.eq.s32.totalorder %s23, 1
      %p144 = por %p142, %p143
      %p145 = scmp.ne.s32.totalorder %s137, %s140
      %p146 = scmp.eq.s32.totalorder %s23, 0
      %p147 = por %p145, %p146
      %p148 = scmp.ne.s32.totalorder %s137, %s140
      %p149 = scmp.eq.s32.totalorder %s28, 1
      %p150 = por %p148, %p149
      %p151 = scmp.ne.s32.totalorder %s140, %s141
      %p152 = scmp.eq.s32.totalorder %s28, 0
      %p153 = por %p151, %p152
      %p154 = scmp.ne.s32.totalorder %s140, %s141
      %p155 = scmp.eq.s32.totalorder %s29, 1
      %p156 = por %p154, %p155
      %p158 = scmp.ne.s32.totalorder %s141, %s157
      %p159 = scmp.eq.s32.totalorder %s29, 0
      %p160 = por %p158, %p159
      %p161 = scmp.le.s32.totalorder 1, %s23
      %p162 = scmp.lt.s32.totalorder %s23, 3
      %p163 = pnand %p161, %p162
      %p164 = pneg %p163
      // Predicated region
      $region9: #{tpu_custom_call.1} parent=5 // pred_check
        _
      $region10: #{tpu_custom_call.1} parent=5 // pred_check_branch
        %166 = sbr.rel (%p163) target = $region12
      $region11: #{tpu_custom_call.1} parent=5 // pred_region
        %s167 = ssub.s32 %s23, 1
      $region12: #{tpu_custom_call.1} parent=5 // pred_fallthru
        _
      %p168 = scmp.lt.s32.totalorder %s23, 2
      // Predicated region
      $region13: #{tpu_custom_call.1} parent=5 // pred_check
        %p169 = pneg %p168
      $region14: #{tpu_custom_call.1} parent=5 // pred_check_branch
        %171 = sbr.rel (%p169) target = $region16
      $region15: #{tpu_custom_call.1} parent=5 // pred_region
        // Predicated region
        $region17: #{tpu_custom_call.1} parent=15 // pred_check
          %p172 = pneg %p43
        $region18: #{tpu_custom_call.1} parent=15 // pred_check_branch
          %174 = sbr.rel (%p172) target = $region20
        $region19: #{tpu_custom_call.1} parent=15 // pred_region
          %s175 = sand.u32 %s33, 1
          %s176 = scalar_lea.sflag [#allocation3], %s175
          %s177 = sand.u32 %s33, 1
          %s178 = smul.addr %s177, 8
          %s179 = scalar_lea.vmem [#allocation2], %s178
          %s181 = ssub.s32 128, 128
          %182 = vsyncadd %s176, %s181
          %s183 = smul.addr %s23, 128
          %s184 = scalar_lea.hbm %s0, %s183
          %s186 = sshll.u32 %s179, 4
          %s187 = int_to_ptr.vmem [resolvable:$true] %s186
          %189 = dma.hbm_to_vmem [thread:$0]  %s184, 128, %s187, %s176
        $region20: #{tpu_custom_call.1} parent=15 // pred_fallthru
          _
        // Predicated region
        $region21: #{tpu_custom_call.1} parent=15 // pred_check
          %p190 = pneg %p69
        $region22: #{tpu_custom_call.1} parent=15 // pred_check_branch
          %192 = sbr.rel (%p190) target = $region24
        $region23: #{tpu_custom_call.1} parent=15 // pred_region
          %s193 = sand.u32 %s59, 1
          %s194 = scalar_lea.sflag [#allocation6], %s193
          %s195 = sand.u32 %s59, 1
          %s196 = smul.addr %s195, 16
          %s197 = scalar_lea.vmem [#allocation5], %s196
          %s199 = ssub.s32 256, 256
          %200 = vsyncadd %s194, %s199
          %s201 = smul.addr %s23, 2
          %s202 = smul.addr %s201, 128
          %s203 = scalar_lea.hbm %s1, %s202
          %s204 = sshll.u32 %s197, 4
          %s205 = int_to_ptr.vmem [resolvable:$true] %s204
          %210 = dma.hbm_to_vmem [thread:$0]  %s203, 256, %s205, %s194, 128, 128, 8
        $region24: #{tpu_custom_call.1} parent=15 // pred_fallthru
          _
      $region16: #{tpu_custom_call.1} parent=5 // pred_fallthru
        _
      %p211 = scmp.le.s32.totalorder 1, %s23
      %p212 = scmp.lt.s32.totalorder %s23, 3
      %p213 = pnand %p211, %p212
      %p214 = pneg %p213
      // Predicated region
      $region25: #{tpu_custom_call.1} parent=5 // pred_check
        _
      $region26: #{tpu_custom_call.1} parent=5 // pred_check_branch
        %216 = sbr.rel (%p213) target = $region28
      $region27: #{tpu_custom_call.1} parent=5 // pred_region
        %s217 = ssub.s32 %s23, 1
        %s218 = sand.u32 %s36, 1
        %s219 = scalar_lea.sflag [#allocation3], %s218
        %s220 = sand.u32 %s36, 1
        %s221 = smul.addr %s220, 8
        %s222 = scalar_lea.vmem [#allocation2], %s221
        // Predicated region
        $region29: #{tpu_custom_call.1} parent=27 // pred_check
          %p223 = pneg %p49
        $region30: #{tpu_custom_call.1} parent=27 // pred_check_branch
          %225 = sbr.rel (%p223) target = $region32
        $region31: #{tpu_custom_call.1} parent=27 // pred_region
          %226 = dma.done %s219, 128
        $region32: #{tpu_custom_call.1} parent=27 // pred_fallthru
          _
        %s227 = sand.u32 %s62, 1
        %s228 = scalar_lea.sflag [#allocation6], %s227
        %s229 = sand.u32 %s62, 1
        %s230 = smul.addr %s229, 16
        %s231 = scalar_lea.vmem [#allocation5], %s230
        // Predicated region
        $region33: #{tpu_custom_call.1} parent=27 // pred_check
          %p232 = pneg %p75
        $region34: #{tpu_custom_call.1} parent=27 // pred_check_branch
          %234 = sbr.rel (%p232) target = $region36
        $region35: #{tpu_custom_call.1} parent=27 // pred_region
          %235 = dma.done %s228, 256
        $region36: #{tpu_custom_call.1} parent=27 // pred_fallthru
          _
        %s236 = sand.u32 %s36, 1
        %s237 = scalar_lea.sflag [#allocation3], %s236
        %s238 = sand.u32 %s36, 1
        %s239 = smul.addr %s238, 8
        %s240 = scalar_lea.vmem [#allocation2], %s239
        %p241 = pneg %p49
        %p242 = pneg %p46
        %s243 = sand.u32 %s62, 1
        %s244 = scalar_lea.sflag [#allocation6], %s243
        %s245 = sand.u32 %s62, 1
        %s246 = smul.addr %s245, 16
        %s247 = scalar_lea.vmem [#allocation5], %s246
        %p248 = pneg %p75
        %p249 = pneg %p72
        %p250 = pneg %p101
        %p251 = pneg %p98
        %s252 = sand.u32 %s88, 1
        %s253 = scalar_lea.sflag [#allocation4], %s252
        %s254 = sand.u32 %s88, 1
        %s255 = smul.addr %s254, 8
        %s256 = scalar_lea.vmem [#allocation7], %s255
        %p257 = pneg %p127
        %p258 = pneg %p124
        %s259 = sand.u32 %s28, 1
        %s260 = scalar_lea.sflag [#allocation9], %s259
        %s261 = sand.u32 %s114, 1
        %s262 = smul.addr %s261, 16
        %s263 = scalar_lea.vmem [#allocation8], %s262
        %p264 = pneg %p153
        %p265 = pneg %p150
        %s266 = sand.u32 %s28, 1
        %s267 = scalar_lea.sflag [#allocation9], %s266
        %s268 = sand.u32 %s140, 1
        %s269 = smul.addr %s268, 8
        %s270 = scalar_lea.vmem [#allocation10], %s269
        %v271 = vld [vmem:[%s222] sm:$0xff]
        %v272 = vld [vmem:[%s231] sm:$0xff]
        %v273 = vld [vmem:[%s231 + $0x8] sm:$0xff]
        %vm274 = vcmask 261120
        %v276 = vsel %vm274, %v271, 0
        %v279 = vsel %vm274, %v272, 0
        %v282 = vsel %vm274, %v273, 0
        %284 = vmatprep.subr.mxu0 0.0
        %285 = vmatpush1.xpose.msra.mxu0 %v279
        %286 = vmatprep.subr.mxu0 0.0
        %287 = vmatpush1.xpose.msra.mxu0 %v282
        %288 = vmatprep.subr.mxu0 0.0
        %289 = vmatpush1.xpose.msra.mxu0 0.0
        %290 = vmatprep.subr.mxu0 0.0
        %291 = vmatpush1.xpose.msra.mxu0 0.0
        %292 = vmatprep.subr.mxu0 0.0
        %293 = vmatpush1.xpose.msra.mxu0 0.0
        %294 = vmatprep.subr.mxu0 0.0
        %295 = vmatpush1.xpose.msra.mxu0 0.0
        %296 = vmatprep.subr.mxu0 0.0
        %297 = vmatpush1.xpose.msra.mxu0 0.0
        %298 = vmatprep.subr.mxu0 0.0
        %299 = vmatpush1.xpose.msra.mxu0 0.0
        %300 = vmatprep.subr.mxu0 0.0
        %301 = vmatpush1.xpose.msra.mxu0 0.0
        %302 = vmatprep.subr.mxu0 0.0
        %303 = vmatpush1.xpose.msra.mxu0 0.0
        %304 = vmatprep.subr.mxu0 0.0
        %305 = vmatpush1.xpose.msra.mxu0 0.0
        %306 = vmatprep.subr.mxu0 0.0
        %307 = vmatpush1.xpose.msra.mxu0 0.0
        %308 = vmatprep.subr.mxu0 0.0
        %309 = vmatpush1.xpose.msra.mxu0 0.0
        %310 = vmatprep.subr.mxu0 0.0
        %311 = vmatpush1.xpose.msra.mxu0 0.0
        %312 = vmatprep.subr.mxu0 0.0
        %313 = vmatpush1.xpose.msra.mxu0 0.0
        %314 = vmatprep.subr.mxu0 0.0
        %315 = vmatpush1.xpose.msra.mxu0 0.0
        %316 = vmatprep.subr.mxu0 0.0
        %317 = vmatpush1.xpose.msra.mxu0 0.0
        %318 = vmatprep.subr.mxu0 0.0
        %319 = vmatpush1.xpose.msra.mxu0 0.0
        %320 = vmatprep.subr.mxu0 0.0
        %321 = vmatpush1.xpose.msra.mxu0 0.0
        %322 = vmatprep.subr.mxu0 0.0
        %323 = vmatpush1.xpose.msra.mxu0 0.0
        %324 = vmatprep.subr.mxu0 0.0
        %325 = vmatpush1.xpose.msra.mxu0 0.0
        %326 = vmatprep.subr.mxu0 0.0
        %327 = vmatpush1.xpose.msra.mxu0 0.0
        %328 = vmatprep.subr.mxu0 0.0
        %329 = vmatpush1.xpose.msra.mxu0 0.0
        %330 = vmatprep.subr.mxu0 0.0
        %331 = vmatpush1.xpose.msra.mxu0 0.0
        %332 = vmatprep.subr.mxu0 0.0
        %333 = vmatpush1.xpose.msra.mxu0 0.0
        %334 = vmatprep.subr.mxu0 0.0
        %335 = vmatpush1.xpose.msra.mxu0 0.0
        %336 = vmatprep.subr.mxu0 0.0
        %337 = vmatpush1.xpose.msra.mxu0 0.0
        %338 = vmatprep.subr.mxu0 0.0
        %339 = vmatpush1.xpose.msra.mxu0 0.0
        %340 = vmatprep.subr.mxu0 0.0
        %341 = vmatpush1.xpose.msra.mxu0 0.0
        %342 = vmatprep.subr.mxu0 0.0
        %343 = vmatpush1.xpose.msra.mxu0 0.0
        %344 = vmatprep.subr.mxu0 0.0
        %345 = vmatpush1.xpose.msra.mxu0 0.0
        %346 = vmatprep.subr.mxu0 0.0
        %347 = vmatpush1.xpose.msra.mxu0 0.0
        %348 = vmatprep.mubr.f32.mxu0 0.0
        %349 = vmatmul.mubr.f32.gmra.mrb[0].mxu0 %v276
        %v350 = vpop.f32.mrb[0].mxu0
        %v351 = vadd.f32 0.0, %v350
        %v352 = vpop.f32.mrb[0].mxu0
        %353 = vdwg.mxu0
        %vm354 = vcmask 130048
        %355 = vst.msk [vmem:[%s270] sm:$0xff] %vm354, %v351
        %v356 = vsel %vm354, %v351, -inf
        %357 = vmax.xlane.f32.xlu0 %v356
        %v358 = vpop.xlane.xlu0 %357
        %v359 = vsub.f32 %v351, %v358
        %v360 = vmul.f32 %v359, 1.442695
        %v361 = vpow.pop %v360
        %v362 = vsel %vm354, %v361, 0.0
        %363 = vadd.xlane.f32.xlu0 %v362
        %v364 = vpop.xlane.xlu0 %363
        %v365 = vrcp.pop %v364
        %v366 = vmul.f32 %v361, %v365
        %v368 = vsel %vm354, %v366, 0
        %370 = vmatprep.subr.mxu0 0.0
        %371 = vmatpush1.msra.mxu0 %v272
        %372 = vmatprep.subr.mxu0 0.0
        %373 = vmatpush1.msra.mxu0 %v273
        %374 = vmatprep.subr.mxu0 0.0
        %375 = vmatpush1.msra.mxu0 0.0
        %376 = vmatprep.subr.mxu0 0.0
        %377 = vmatpush1.msra.mxu0 0.0
        %378 = vmatprep.subr.mxu0 0.0
        %379 = vmatpush1.msra.mxu0 0.0
        %380 = vmatprep.subr.mxu0 0.0
        %381 = vmatpush1.msra.mxu0 0.0
        %382 = vmatprep.subr.mxu0 0.0
        %383 = vmatpush1.msra.mxu0 0.0
        %384 = vmatprep.subr.mxu0 0.0
        %385 = vmatpush1.msra.mxu0 0.0
        %386 = vmatprep.subr.mxu0 0.0
        %387 = vmatpush1.msra.mxu0 0.0
        %388 = vmatprep.subr.mxu0 0.0
        %389 = vmatpush1.msra.mxu0 0.0
        %390 = vmatprep.subr.mxu0 0.0
        %391 = vmatpush1.msra.mxu0 0.0
        %392 = vmatprep.subr.mxu0 0.0
        %393 = vmatpush1.msra.mxu0 0.0
        %394 = vmatprep.subr.mxu0 0.0
        %395 = vmatpush1.msra.mxu0 0.0
        %396 = vmatprep.subr.mxu0 0.0
        %397 = vmatpush1.msra.mxu0 0.0
        %398 = vmatprep.subr.mxu0 0.0
        %399 = vmatpush1.msra.mxu0 0.0
        %400 = vmatprep.subr.mxu0 0.0
        %401 = vmatpush1.msra.mxu0 0.0
        %402 = vmatprep.subr.mxu0 0.0
        %403 = vmatpush1.msra.mxu0 0.0
        %404 = vmatprep.subr.mxu0 0.0
        %405 = vmatpush1.msra.mxu0 0.0
        %406 = vmatprep.subr.mxu0 0.0
        %407 = vmatpush1.msra.mxu0 0.0
        %408 = vmatprep.subr.mxu0 0.0
        %409 = vmatpush1.msra.mxu0 0.0
        %410 = vmatprep.subr.mxu0 0.0
        %411 = vmatpush1.msra.mxu0 0.0
        %412 = vmatprep.subr.mxu0 0.0
        %413 = vmatpush1.msra.mxu0 0.0
        %414 = vmatprep.subr.mxu0 0.0
        %415 = vmatpush1.msra.mxu0 0.0
        %416 = vmatprep.subr.mxu0 0.0
        %417 = vmatpush1.msra.mxu0 0.0
        %418 = vmatprep.subr.mxu0 0.0
        %419 = vmatpush1.msra.mxu0 0.0
        %420 = vmatprep.subr.mxu0 0.0
        %421 = vmatpush1.msra.mxu0 0.0
        %422 = vmatprep.subr.mxu0 0.0
        %423 = vmatpush1.msra.mxu0 0.0
        %424 = vmatprep.subr.mxu0 0.0
        %425 = vmatpush1.msra.mxu0 0.0
        %426 = vmatprep.subr.mxu0 0.0
        %427 = vmatpush1.msra.mxu0 0.0
        %428 = vmatprep.subr.mxu0 0.0
        %429 = vmatpush1.msra.mxu0 0.0
        %430 = vmatprep.subr.mxu0 0.0
        %431 = vmatpush1.msra.mxu0 0.0
        %432 = vmatprep.subr.mxu0 0.0
        %433 = vmatpush1.msra.mxu0 0.0
        %434 = vmatprep.mubr.f32.mxu0 0.0
        %435 = vmatmul.mubr.f32.gmra.mrb[0].mxu0 %v368
        %v436 = vpop.f32.mrb[0].mxu0
        %v437 = vadd.f32 0.0, %v436
        %v438 = vpop.f32.mrb[0].mxu0
        %439 = vdwg.mxu0
        %440 = vst.msk [vmem:[%s256] sm:$0xff] %vm274, %v437
        %v441 = vrot.slane %v356, 4
        %v442 = vmax.f32 %v356, %v441
        %v443 = vrot.slane %v442, 2
        %v444 = vmax.f32 %v442, %v443
        %v445 = vrot.slane %v444, 1
        %v446 = vmax.f32 %v444, %v445
        %v447 = vsub.f32 %v351, %v446
        %v448 = vmul.f32 %v447, 1.442695
        %v449 = vpow.pop %v448
        %v450 = vsel %vm354, %v449, 0.0
        %v451 = vrot.slane %v450, 4
        %v452 = vadd.f32 %v450, %v451
        %v453 = vrot.slane %v452, 2
        %v454 = vadd.f32 %v452, %v453
        %v455 = vrot.slane %v454, 1
        %v456 = vadd.f32 %v454, %v455
        %v457 = vrcp.pop %v456
        %v458 = vmul.f32 %v449, %v457
        %459 = vxpose.xlu0.b32.start [1/16] %v458, 128
        %460 = vxpose.xlu0.b32.cont [2/16] 0.0, 128
        %461 = vxpose.xlu0.b32.cont [3/16] 0.0, 128
        %462 = vxpose.xlu0.b32.cont [4/16] 0.0, 128
        %463 = vxpose.xlu0.b32.cont [5/16] 0.0, 128
        %464 = vxpose.xlu0.b32.cont [6/16] 0.0, 128
        %465 = vxpose.xlu0.b32.cont [7/16] 0.0, 128
        %466 = vxpose.xlu0.b32.cont [8/16] 0.0, 128
        %467 = vxpose.xlu0.b32.cont [9/16] 0.0, 128
        %468 = vxpose.xlu0.b32.cont [10/16] 0.0, 128
        %469 = vxpose.xlu0.b32.cont [11/16] 0.0, 128
        %470 = vxpose.xlu0.b32.cont [12/16] 0.0, 128
        %471 = vxpose.xlu0.b32.cont [13/16] 0.0, 128
        %472 = vxpose.xlu0.b32.cont [14/16] 0.0, 128
        %473 = vxpose.xlu0.b32.cont [15/16] 0.0, 128
        %474 = vxpose.xlu0.b32.end [16/16] 0.0, 128
        %v475 = vpop.trf.xlu0
        %v476 = vpop.trf.xlu0
        %v477 = vpop.trf.xlu0
        %v478 = vpop.trf.xlu0
        %v479 = vpop.trf.xlu0
        %v480 = vpop.trf.xlu0
        %v481 = vpop.trf.xlu0
        %v482 = vpop.trf.xlu0
        %v483 = vpop.trf.xlu0
        %v484 = vpop.trf.xlu0
        %v485 = vpop.trf.xlu0
        %v486 = vpop.trf.xlu0
        %v487 = vpop.trf.xlu0
        %v488 = vpop.trf.xlu0
        %v489 = vpop.trf.xlu0
        %v490 = vpop.trf.xlu0
        %vm491 = vcmask 64512
        %v493 = vsel %vm491, %v475, 0
        %v496 = vsel %vm491, %v476, 0
        %498 = vmatprep.subr.mxu0 0.0
        %499 = vmatpush1.msra.mxu0 %v271
        %500 = vmatprep.subr.mxu0 0.0
        %501 = vmatpush1.msra.mxu0 0.0
        %502 = vmatprep.subr.mxu0 0.0
        %503 = vmatpush1.msra.mxu0 0.0
        %504 = vmatprep.subr.mxu0 0.0
        %505 = vmatpush1.msra.mxu0 0.0
        %506 = vmatprep.subr.mxu0 0.0
        %507 = vmatpush1.msra.mxu0 0.0
        %508 = vmatprep.subr.mxu0 0.0
        %509 = vmatpush1.msra.mxu0 0.0
        %510 = vmatprep.subr.mxu0 0.0
        %511 = vmatpush1.msra.mxu0 0.0
        %512 = vmatprep.subr.mxu0 0.0
        %513 = vmatpush1.msra.mxu0 0.0
        %514 = vmatprep.subr.mxu0 0.0
        %515 = vmatpush1.msra.mxu0 0.0
        %516 = vmatprep.subr.mxu0 0.0
        %517 = vmatpush1.msra.mxu0 0.0
        %518 = vmatprep.subr.mxu0 0.0
        %519 = vmatpush1.msra.mxu0 0.0
        %520 = vmatprep.subr.mxu0 0.0
        %521 = vmatpush1.msra.mxu0 0.0
        %522 = vmatprep.subr.mxu0 0.0
        %523 = vmatpush1.msra.mxu0 0.0
        %524 = vmatprep.subr.mxu0 0.0
        %525 = vmatpush1.msra.mxu0 0.0
        %526 = vmatprep.subr.mxu0 0.0
        %527 = vmatpush1.msra.mxu0 0.0
        %528 = vmatprep.subr.mxu0 0.0
        %529 = vmatpush1.msra.mxu0 0.0
        %530 = vmatprep.subr.mxu0 0.0
        %531 = vmatpush1.msra.mxu0 0.0
        %532 = vmatprep.subr.mxu0 0.0
        %533 = vmatpush1.msra.mxu0 0.0
        %534 = vmatprep.subr.mxu0 0.0
        %535 = vmatpush1.msra.mxu0 0.0
        %536 = vmatprep.subr.mxu0 0.0
        %537 = vmatpush1.msra.mxu0 0.0
        %538 = vmatprep.subr.mxu0 0.0
        %539 = vmatpush1.msra.mxu0 0.0
        %540 = vmatprep.subr.mxu0 0.0
        %541 = vmatpush1.msra.mxu0 0.0
        %542 = vmatprep.subr.mxu0 0.0
        %543 = vmatpush1.msra.mxu0 0.0
        %544 = vmatprep.subr.mxu0 0.0
        %545 = vmatpush1.msra.mxu0 0.0
        %546 = vmatprep.subr.mxu0 0.0
        %547 = vmatpush1.msra.mxu0 0.0
        %548 = vmatprep.subr.mxu0 0.0
        %549 = vmatpush1.msra.mxu0 0.0
        %550 = vmatprep.subr.mxu0 0.0
        %551 = vmatpush1.msra.mxu0 0.0
        %552 = vmatprep.subr.mxu0 0.0
        %553 = vmatpush1.msra.mxu0 0.0
        %554 = vmatprep.subr.mxu0 0.0
        %555 = vmatpush1.msra.mxu0 0.0
        %556 = vmatprep.subr.mxu0 0.0
        %557 = vmatpush1.msra.mxu0 0.0
        %558 = vmatprep.subr.mxu0 0.0
        %559 = vmatpush1.msra.mxu0 0.0
        %560 = vmatprep.subr.mxu0 0.0
        %561 = vmatpush1.msra.mxu0 0.0
        %562 = vmatprep.mubr.f32.mxu0 0.0
        %563 = vmatmul.mubr.f32.gmra.mrb[0].mxu0 %v493
        %v564 = vpop.f32.mrb[0].mxu0
        %v565 = vadd.f32 0.0, %v564
        %v566 = vpop.f32.mrb[0].mxu0
        %567 = vmatprep.mubr.f32.mxu0 0.0
        %568 = vmatmul.mubr.f32.gmra.mrb[0].mxu0 %v496
        %v569 = vpop.f32.mrb[0].mxu0
        %v570 = vadd.f32 0.0, %v569
        %v571 = vpop.f32.mrb[0].mxu0
        %572 = vdwg.mxu0
        %573 = vst.msk [vmem:[%s263] sm:$0xff] %vm274, %v565
        %574 = vst.msk [vmem:[%s263 + $0x8] sm:$0xff] %vm274, %v570
        %s575 = sand.u32 %s88, 1
        %s576 = scalar_lea.sflag [#allocation4], %s575
        %s577 = sand.u32 %s88, 1
        %s578 = smul.addr %s577, 8
        %s579 = scalar_lea.vmem [#allocation7], %s578
        %s580 = sand.u32 %s28, 1
        %s581 = scalar_lea.sflag [#allocation9], %s580
        %s582 = sand.u32 %s114, 1
        %s583 = smul.addr %s582, 16
        %s584 = scalar_lea.vmem [#allocation8], %s583
        %s585 = sand.u32 %s28, 1
        %s586 = scalar_lea.sflag [#allocation9], %s585
        %s587 = sand.u32 %s140, 1
        %s588 = smul.addr %s587, 8
        %s589 = scalar_lea.vmem [#allocation10], %s588
        // Predicated region
        $region37: #{tpu_custom_call.1} parent=27 // pred_check
          %p590 = pneg %p98
        $region38: #{tpu_custom_call.1} parent=27 // pred_check_branch
          %592 = sbr.rel (%p590) target = $region40
        $region39: #{tpu_custom_call.1} parent=27 // pred_region
          %s594 = ssub.s32 128, 128
          %595 = vsyncadd %s576, %s594
          %s596 = smul.addr %s28, 128
          %s597 = scalar_lea.hbm %s2, %s596
          %s599 = sshll.u32 %s579, 4
          %s600 = int_to_ptr.vmem [resolvable:$true] %s599
          %602 = dma.vmem_to_hbm [thread:$0]  %s600, 128, %s597, %s576
        $region40: #{tpu_custom_call.1} parent=27 // pred_fallthru
          _
        // Predicated region
        $region41: #{tpu_custom_call.1} parent=27 // pred_check
          %p603 = pneg %p124
        $region42: #{tpu_custom_call.1} parent=27 // pred_check_branch
          %605 = sbr.rel (%p603) target = $region44
        $region43: #{tpu_custom_call.1} parent=27 // pred_region
          %s607 = ssub.s32 256, 256
          %608 = vsyncadd %s581, %s607
          %s609 = smul.addr %s28, 2
          %s610 = smul.addr %s609, 128
          %s611 = scalar_lea.hbm %s3, %s610
          %s612 = sshll.u32 %s584, 4
          %s613 = int_to_ptr.vmem [resolvable:$true] %s612
          %618 = dma.vmem_to_hbm [thread:$0]  %s613, 256, %s611, %s581, 128, 128, 8
        $region44: #{tpu_custom_call.1} parent=27 // pred_fallthru
          _
        // Predicated region
        $region45: #{tpu_custom_call.1} parent=27 // pred_check
          %p619 = pneg %p150
        $region46: #{tpu_custom_call.1} parent=27 // pred_check_branch
          %621 = sbr.rel (%p619) target = $region48
        $region47: #{tpu_custom_call.1} parent=27 // pred_region
          %s623 = ssub.s32 128, 128
          %624 = vsyncadd %s586, %s623
          %s625 = smul.addr %s28, 128
          %s626 = scalar_lea.hbm %s4, %s625
          %s628 = sshll.u32 %s589, 4
          %s629 = int_to_ptr.vmem [resolvable:$true] %s628
          %631 = dma.vmem_to_hbm [thread:$0]  %s629, 128, %s626, %s586
        $region48: #{tpu_custom_call.1} parent=27 // pred_fallthru
          _
      $region28: #{tpu_custom_call.1} parent=5 // pred_fallthru
        _
      %p632 = scmp.le.s32.totalorder 2, %s23
      // Predicated region
      $region49: #{tpu_custom_call.1} parent=5 // pred_check
        %p633 = pneg %p632
      $region50: #{tpu_custom_call.1} parent=5 // pred_check_branch
        %635 = sbr.rel (%p633) target = $region52
      $region51: #{tpu_custom_call.1} parent=5 // pred_region
        %s636 = ssub.s32 %s23, 2
        // Predicated region
        $region53: #{tpu_custom_call.1} parent=51 // pred_check
          %p637 = pneg %p104
        $region54: #{tpu_custom_call.1} parent=51 // pred_check_branch
          %639 = sbr.rel (%p637) target = $region56
        $region55: #{tpu_custom_call.1} parent=51 // pred_region
          %s640 = sand.u32 %s89, 1
          %s641 = scalar_lea.sflag [#allocation4], %s640
          %s642 = sand.u32 %s89, 1
          %s643 = smul.addr %s642, 8
          %s644 = scalar_lea.vmem [#allocation7], %s643
          %645 = dma.done %s641, 128
        $region56: #{tpu_custom_call.1} parent=51 // pred_fallthru
          _
        // Predicated region
        $region57: #{tpu_custom_call.1} parent=51 // pred_check
          %p646 = pneg %p130
        $region58: #{tpu_custom_call.1} parent=51 // pred_check_branch
          %648 = sbr.rel (%p646) target = $region60
        $region59: #{tpu_custom_call.1} parent=51 // pred_region
          %s649 = sand.u32 %s29, 1
          %s650 = scalar_lea.sflag [#allocation9], %s649
          %s651 = sand.u32 %s115, 1
          %s652 = smul.addr %s651, 16
          %s653 = scalar_lea.vmem [#allocation8], %s652
          %654 = dma.done %s650, 256
        $region60: #{tpu_custom_call.1} parent=51 // pred_fallthru
          _
        // Predicated region
        $region61: #{tpu_custom_call.1} parent=51 // pred_check
          %p655 = pneg %p156
        $region62: #{tpu_custom_call.1} parent=51 // pred_check_branch
          %657 = sbr.rel (%p655) target = $region64
        $region63: #{tpu_custom_call.1} parent=51 // pred_region
          %s658 = sand.u32 %s29, 1
          %s659 = scalar_lea.sflag [#allocation9], %s658
          %s660 = sand.u32 %s141, 1
          %s661 = smul.addr %s660, 8
          %s662 = scalar_lea.vmem [#allocation10], %s661
          %663 = dma.done %s659, 128
        $region64: #{tpu_custom_call.1} parent=51 // pred_fallthru
          _
      $region52: #{tpu_custom_call.1} parent=5 // pred_fallthru
        _
    $region6: #{tpu_custom_call.1} parent=1 // loop_footer
      %s27 = sadd.s32 1, %s23
    $region7: #{tpu_custom_call.1} parent=1 // loop_footer_branch
      %22 = sbr.rel target = $region3
    $region8: #{tpu_custom_call.1} parent=1 // loop_exit
      _
    %664 = vsyncpa [#allocation3], 1
    %s665 = scalar_lea.sflag [#allocation3], 1
    %666 = vsyncpa %s665, 1
    %667 = vsyncpa [#allocation6], 1
    %s668 = scalar_lea.sflag [#allocation6], 1
    %669 = vsyncpa %s668, 1
    %670 = vsyncpa [#allocation4], 1
    %s671 = scalar_lea.sflag [#allocation4], 1
    %672 = vsyncpa %s671, 1
    %673 = vsyncpa [#allocation9], 1
    %s674 = scalar_lea.sflag [#allocation9], 1
    %675 = vsyncpa %s674, 1

</llo_original>
